<compile_context>
chip_gen: v5e
topology: v5e:2x2
jax: 0.10.0
libtpu: 0.0.40
codegen_flags: <defaults>
</compile_context>

<pallas_src>
import numpy as np
import jax
import jax.numpy as jnp
from jax.experimental import pallas as pl
from jax.experimental.pallas import tpu as pltpu

POOL_SIZES = (1, 2, 3, 6)


# ---------------------------------------------------------------------------
# Exact linear operators for AdaptiveAvgPool2d and bilinear(align_corners=True)
# ---------------------------------------------------------------------------
def _pool_matrix(n_in, n_out):
    """(n_out, n_in) adaptive-average-pool weights (PyTorch bin rule)."""
    m = np.zeros((n_out, n_in), np.float32)
    for i in range(n_out):
        s = (i * n_in) // n_out
        e = -(-((i + 1) * n_in) // n_out)  # ceil
        m[i, s:e] = 1.0 / (e - s)
    return m


def _upsample_matrix(n_in, n_out):
    """(n_out, n_in) bilinear interpolation weights, align_corners=True."""
    if n_in == 1:
        return np.ones((n_out, 1), np.float32)
    if n_out == 1:
        # PyTorch align_corners with output size 1: scale -> 0, so it samples
        # source index 0 exactly.  Only reachable when H==1 or W==1.
        m = np.zeros((1, n_in), np.float32)
        m[0, 0] = 1.0
        return m
    src = np.arange(n_out, dtype=np.float64) * (n_in - 1) / (n_out - 1)
    lo = np.minimum(np.floor(src).astype(np.int64), n_in - 2)
    frac = (src - lo).astype(np.float32)
    m = np.zeros((n_out, n_in), np.float32)
    m[np.arange(n_out), lo] += 1.0 - frac
    m[np.arange(n_out), lo + 1] += frac
    return m


def _round_up(n, m):
    return -(-n // m) * m


# ---------------------------------------------------------------------------
# Fused PyramidPooling kernel
# ---------------------------------------------------------------------------
def _make_ppm_kernel(branch_rows):
    """branch_rows: tuple of (row_offset, padded_rows) per pyramid branch."""

    def kernel(x_ref, pool_ref, up_ref, w_id_ref, w_eff_ref, bias_ref, o_ref):
        x = x_ref[0]                                            # (HW, Cin) bf16

        # Identity slot of the channel concat (out-BN scale already folded).
        acc = jnp.dot(x, w_id_ref[...],
                      preferred_element_type=jnp.float32)       # (HW, Cout) f32

        # All four adaptive average pools in one stacked matmul.
        pooled = jnp.dot(pool_ref[...], x,
                         preferred_element_type=jnp.float32)    # (S, Cin) f32
        pooled = pooled.astype(jnp.bfloat16)

        # Per-branch folded weight: (1x1 conv + branch BN + out-conv slice).
        convs = []
        for k, (off, rows) in enumerate(branch_rows):
            convs.append(jnp.dot(pooled[off:off + rows], w_eff_ref[k],
                                 preferred_element_type=jnp.float32))
        conv_all = jnp.concatenate(convs, axis=0).astype(jnp.bfloat16)  # (S, Cout)

        # Stacked bilinear (align_corners=True) upsample; the column-stacked
        # operator sums every branch's contribution in a single matmul.
        acc = acc + jnp.dot(up_ref[...], conv_all,
                            preferred_element_type=jnp.float32)

        # f32 epilogue + single lane-dense store of the output tile.
        o_ref[0] = (acc + bias_ref[...]).astype(o_ref.dtype)

    return kernel


def pyramid_pooling(x_nchw, params, pool_sizes=POOL_SIZES):
    """PyramidPooling forward.  x: (B, Cin, H, W) NCHW -> (B, Cout, H, W)."""
    B, Cin, H, W = x_nchw.shape
    HW = H * W
    inter = params['w_branch'].shape[-1]
    Cout = params['w_out'].shape[-1]
    n_br = len(pool_sizes)

    # NCHW -> (B, H*W, C): channel on lanes (fully dense when C % 128 == 0).
    x = jnp.transpose(x_nchw, (0, 2, 3, 1)).reshape(B, HW, Cin)
    x = x.astype(jnp.bfloat16)

    # ---- trace-time folding of all BatchNorms + the out-conv slices --------
    # (params are jit constants, so this folds at compile time.)
    w_out = params['w_out'] * params['scale_out'][0]         # fold out-BN scale
    w_id = w_out[:Cin].astype(jnp.bfloat16)                  # (Cin, Cout)
    w_eff = []
    bias_total = params['bias_out'][0].astype(jnp.float32)   # (Cout,)
    for k in range(n_br):
        w_slice = w_out[Cin + k * inter: Cin + (k + 1) * inter]   # (inter, Cout)
        w_eff.append((params['w_branch'][k] * params['scale_branch'][k][0])
                     @ w_slice)                                   # (Cin, Cout)
        bias_total = bias_total + params['bias_branch'][k][0] @ w_slice
    w_eff = jnp.stack(w_eff).astype(jnp.bfloat16)             # (n_br, Cin, Cout)
    bias_total = bias_total.reshape(1, Cout)                   # f32

    # ---- stacked pool / upsample operators (tiny trace-time numpy) ---------
    pool_blocks, up_blocks, branch_rows = [], [], []
    off = 0
    for s in pool_sizes:
        ph, pw = _pool_matrix(H, s), _pool_matrix(W, s)
        uh, uw = _upsample_matrix(s, H), _upsample_matrix(s, W)
        s2 = s * s
        rows = _round_up(s2, 16)          # bf16 packs 16 rows per vreg tile
        pool_blocks.append(np.pad(np.kron(ph, pw), ((0, rows - s2), (0, 0))))
        up_blocks.append(np.pad(np.kron(uh, uw), ((0, 0), (0, rows - s2))))
        branch_rows.append((off, rows))
        off += rows
    S = off                                                    # 96 for (1,2,3,6)
    pool_all = jnp.asarray(np.concatenate(pool_blocks, 0), jnp.bfloat16)  # (S, HW)
    up_all = jnp.asarray(np.concatenate(up_blocks, 1), jnp.bfloat16)      # (HW, S)

    # Advisory cost estimate so XLA can schedule around the custom call.
    flops = 2 * B * (HW * Cin * Cout + S * HW * Cin
                     + S * Cin * Cout + HW * S * Cout)
    bytes_accessed = (2 * x.size + 4 * B * HW * Cout
                      + 2 * (pool_all.size + up_all.size
                             + w_id.size + w_eff.size)
                      + 4 * bias_total.size)

    # Constant operands have index_map -> 0 so they are fetched once.
    # (pipeline_mode=pl.Buffered(1) would halve their resident VMEM; left at
    #  the default here — the whole constant set is < 0.5 MiB at this scale.)
    in_specs = [
        pl.BlockSpec((1, HW, Cin), lambda b: (b, 0, 0)),       # x
        pl.BlockSpec((S, HW), lambda b: (0, 0)),               # stacked pool
        pl.BlockSpec((HW, S), lambda b: (0, 0)),               # stacked upsample
        pl.BlockSpec((Cin, Cout), lambda b: (0, 0)),           # identity weight
        pl.BlockSpec((n_br, Cin, Cout), lambda b: (0, 0, 0)),  # branch weights
        pl.BlockSpec((1, Cout), lambda b: (0, 0)),             # fused bias
    ]

    out = pl.pallas_call(
        _make_ppm_kernel(tuple(branch_rows)),
        out_shape=jax.ShapeDtypeStruct((B, HW, Cout), jnp.float32),
        grid=(B,),
        in_specs=in_specs,
        out_specs=pl.BlockSpec((1, HW, Cout), lambda b: (b, 0, 0)),
        compiler_params=pltpu.CompilerParams(
            dimension_semantics=("parallel",)),   # batch -> v7x's 2 TensorCores
        cost_estimate=pl.CostEstimate(flops=int(flops), transcendentals=0,
                                      bytes_accessed=int(bytes_accessed)),
    )(x, pool_all, up_all, w_id, w_eff, bias_total)

    return jnp.transpose(out.reshape(B, H, W, Cout), (0, 3, 1, 2))


# ---------------------------------------------------------------------------
# Parameters: conv weights stored as (Cin, Cout); BatchNorm (eval mode) folded
# to per-channel scale/bias.
# ---------------------------------------------------------------------------
def init_params(key, in_channels, out_channels, n_br=len(POOL_SIZES)):
    inter = in_channels // 4
    k = jax.random.split(key, 6)
    return {
        'w_branch': 0.05 * jax.random.normal(k[0], (n_br, in_channels, inter),
                                             jnp.float32),
        'scale_branch': 1.0 + 0.1 * jax.random.normal(k[2], (n_br, 1, inter),
                                                      jnp.float32),
        'bias_branch': 0.1 * jax.random.normal(k[3], (n_br, 1, inter),
                                               jnp.float32),
        'w_out': 0.05 * jax.random.normal(k[1], (2 * in_channels, out_channels),
                                          jnp.float32),
        'scale_out': 1.0 + 0.1 * jax.random.normal(k[4], (1, out_channels),
                                                   jnp.float32),
        'bias_out': 0.1 * jax.random.normal(k[5], (1, out_channels),
                                            jnp.float32),
    }


# ---------------------------------------------------------------------------
# Plain-JAX reference (mirrors the PyTorch module op-by-op, all f32)
# ---------------------------------------------------------------------------
def pyramid_pooling_reference(x_nchw, params, pool_sizes=POOL_SIZES):
    B, Cin, H, W = x_nchw.shape
    x = jnp.transpose(x_nchw, (0, 2, 3, 1))          # NHWC
    feats = [x]
    for k, s in enumerate(pool_sizes):
        ph, pw = jnp.asarray(_pool_matrix(H, s)), jnp.asarray(_pool_matrix(W, s))
        uh, uw = jnp.asarray(_upsample_matrix(s, H)), jnp.asarray(_upsample_matrix(s, W))
        p = jnp.einsum('ph,bhwc->bpwc', ph, x)
        p = jnp.einsum('qw,bpwc->bpqc', pw, p)
        c = jnp.einsum('bpqc,cd->bpqd', p, params['w_branch'][k])
        c = c * params['scale_branch'][k][0] + params['bias_branch'][k][0]
        u = jnp.einsum('hp,bpqd->bhqd', uh, c)
        u = jnp.einsum('wq,bhqd->bhwd', uw, u)
        feats.append(u)
    cat = jnp.concatenate(feats, axis=-1)
    out = jnp.einsum('bhwc,co->bhwo', cat, params['w_out'])
    out = out * params['scale_out'][0] + params['bias_out'][0]
    return jnp.transpose(out, (0, 3, 1, 2))


# ---------------------------------------------------------------------------
if __name__ == "__main__":
    # Channels chosen as a multiple of 128 so every matmul and the output
    # store are lane-dense (the (8,128)/MXU sweet spot).
    B, in_channels, H, W = 2, 128, 16, 16
    out_channels = 128

    key = jax.random.PRNGKey(0)
    kx, kp = jax.random.split(key)
    x = jax.random.normal(kx, (B, in_channels, H, W), jnp.float32)   # NCHW
    params = init_params(kp, in_channels, out_channels)

    fwd = jax.jit(lambda xx: pyramid_pooling(xx, params))
    out = fwd(x)
    out = jax.block_until_ready(out)

    assert out.shape == (B, out_channels, H, W)
    assert out.dtype == jnp.float32

    # Sanity check against the f32 plain-JAX reference.  Tolerance covers the
    # bf16 operand cast (~1e-3 relative) and the trace-time BN/bias folding.
    ref = jax.block_until_ready(
        jax.jit(lambda xx: pyramid_pooling_reference(xx, params))(x))
    err = float(jnp.max(jnp.abs(out - ref)))
    scale = float(jnp.max(jnp.abs(ref))) + 1e-6
    assert err <= 5e-2 * scale, f"mismatch: max|err|={err} vs max|ref|={scale}"

    print("KERNEL_OK")
</pallas_src>

<mosaic_0001>
module attributes {stable_mosaic.version = 11 : i64} {
  func.func @kernel(%arg0: i32, %arg1: memref<1x256x128xbf16, #tpu.memory_space<vmem>>, %arg2: memref<96x256xbf16, #tpu.memory_space<vmem>>, %arg3: memref<256x96xbf16, #tpu.memory_space<vmem>>, %arg4: memref<128x128xbf16, #tpu.memory_space<vmem>>, %arg5: memref<4x128x128xbf16, #tpu.memory_space<vmem>>, %arg6: memref<1x128xf32, #tpu.memory_space<vmem>>, %arg7: memref<1x256x128xf32, #tpu.memory_space<vmem>>) attributes {dimension_semantics = [#tpu.dimension_semantics<parallel>], iteration_bounds = array<i64: 2>, scalar_prefetch = 0 : i64, scratch_operands = 0 : i64, tpu.core_type = #tpu.core_type<tc>, window_params = [{transform_indices = @transform_0, window_bounds = array<i64: 1, 256, 128>}, {pipeline_mode = #tpu.pipeline_mode<synchronous>, transform_indices = @transform_1, window_bounds = array<i64: 96, 256>}, {pipeline_mode = #tpu.pipeline_mode<synchronous>, transform_indices = @transform_2, window_bounds = array<i64: 256, 96>}, {pipeline_mode = #tpu.pipeline_mode<synchronous>, transform_indices = @transform_3, window_bounds = array<i64: 128, 128>}, {pipeline_mode = #tpu.pipeline_mode<synchronous>, transform_indices = @transform_4, window_bounds = array<i64: 4, 128, 128>}, {pipeline_mode = #tpu.pipeline_mode<synchronous>, transform_indices = @transform_5, window_bounds = array<i64: 1, 128>}, {transform_indices = @transform_6, window_bounds = array<i64: 1, 256, 128>}]} {
    %c0 = arith.constant 0 : index
    %c0_0 = arith.constant 0 : index
    %c0_1 = arith.constant 0 : index
    %0 = vector.load %arg1[%c0, %c0_0, %c0_1] : memref<1x256x128xbf16, #tpu.memory_space<vmem>>, vector<1x256x128xbf16>
    %1 = vector.shape_cast %0 : vector<1x256x128xbf16> to vector<256x128xbf16>
    %c0_2 = arith.constant 0 : index
    %c0_3 = arith.constant 0 : index
    %2 = vector.load %arg4[%c0_2, %c0_3] : memref<128x128xbf16, #tpu.memory_space<vmem>>, vector<128x128xbf16>
    %cst = arith.constant dense<0.000000e+00> : vector<256x128xf32>
    %3 = tpu.matmul %1, %2, %cst {dimension_numbers = #tpu.dot_dimension_numbers<[1], [0], [0], [1], [0, 0, 1, 1], [], []>} : vector<256x128xbf16>, vector<128x128xbf16>, vector<256x128xf32> -> vector<256x128xf32>
    %c0_4 = arith.constant 0 : index
    %c0_5 = arith.constant 0 : index
    %4 = vector.load %arg2[%c0_4, %c0_5] : memref<96x256xbf16, #tpu.memory_space<vmem>>, vector<96x256xbf16>
    %cst_6 = arith.constant dense<0.000000e+00> : vector<96x128xf32>
    %5 = tpu.matmul %4, %1, %cst_6 {dimension_numbers = #tpu.dot_dimension_numbers<[1], [0], [0], [1], [0, 0, 1, 1], [], []>} : vector<96x256xbf16>, vector<256x128xbf16>, vector<96x128xf32> -> vector<96x128xf32>
    %6 = arith.truncf %5 : vector<96x128xf32> to vector<96x128xbf16>
    %7 = vector.extract_strided_slice %6 {offsets = [0, 0], sizes = [16, 128], strides = [1, 1]} : vector<96x128xbf16> to vector<16x128xbf16>
    %c0_7 = arith.constant 0 : index
    %c0_8 = arith.constant 0 : index
    %c0_9 = arith.constant 0 : index
    %8 = vector.load %arg5[%c0_7, %c0_8, %c0_9] : memref<4x128x128xbf16, #tpu.memory_space<vmem>>, vector<1x128x128xbf16>
    %9 = vector.shape_cast %8 : vector<1x128x128xbf16> to vector<128x128xbf16>
    %cst_10 = arith.constant dense<0.000000e+00> : vector<16x128xf32>
    %10 = tpu.matmul %7, %9, %cst_10 {dimension_numbers = #tpu.dot_dimension_numbers<[1], [0], [0], [1], [0, 0, 1, 1], [], []>} : vector<16x128xbf16>, vector<128x128xbf16>, vector<16x128xf32> -> vector<16x128xf32>
    %11 = vector.extract_strided_slice %6 {offsets = [16, 0], sizes = [16, 128], strides = [1, 1]} : vector<96x128xbf16> to vector<16x128xbf16>
    %c1 = arith.constant 1 : index
    %c0_11 = arith.constant 0 : index
    %c0_12 = arith.constant 0 : index
    %12 = vector.load %arg5[%c1, %c0_11, %c0_12] : memref<4x128x128xbf16, #tpu.memory_space<vmem>>, vector<1x128x128xbf16>
    %13 = vector.shape_cast %12 : vector<1x128x128xbf16> to vector<128x128xbf16>
    %cst_13 = arith.constant dense<0.000000e+00> : vector<16x128xf32>
    %14 = tpu.matmul %11, %13, %cst_13 {dimension_numbers = #tpu.dot_dimension_numbers<[1], [0], [0], [1], [0, 0, 1, 1], [], []>} : vector<16x128xbf16>, vector<128x128xbf16>, vector<16x128xf32> -> vector<16x128xf32>
    %15 = vector.extract_strided_slice %6 {offsets = [32, 0], sizes = [16, 128], strides = [1, 1]} : vector<96x128xbf16> to vector<16x128xbf16>
    %c2 = arith.constant 2 : index
    %c0_14 = arith.constant 0 : index
    %c0_15 = arith.constant 0 : index
    %16 = vector.load %arg5[%c2, %c0_14, %c0_15] : memref<4x128x128xbf16, #tpu.memory_space<vmem>>, vector<1x128x128xbf16>
    %17 = vector.shape_cast %16 : vector<1x128x128xbf16> to vector<128x128xbf16>
    %cst_16 = arith.constant dense<0.000000e+00> : vector<16x128xf32>
    %18 = tpu.matmul %15, %17, %cst_16 {dimension_numbers = #tpu.dot_dimension_numbers<[1], [0], [0], [1], [0, 0, 1, 1], [], []>} : vector<16x128xbf16>, vector<128x128xbf16>, vector<16x128xf32> -> vector<16x128xf32>
    %19 = vector.extract_strided_slice %6 {offsets = [48, 0], sizes = [48, 128], strides = [1, 1]} : vector<96x128xbf16> to vector<48x128xbf16>
    %c3 = arith.constant 3 : index
    %c0_17 = arith.constant 0 : index
    %c0_18 = arith.constant 0 : index
    %20 = vector.load %arg5[%c3, %c0_17, %c0_18] : memref<4x128x128xbf16, #tpu.memory_space<vmem>>, vector<1x128x128xbf16>
    %21 = vector.shape_cast %20 : vector<1x128x128xbf16> to vector<128x128xbf16>
    %cst_19 = arith.constant dense<0.000000e+00> : vector<48x128xf32>
    %22 = tpu.matmul %19, %21, %cst_19 {dimension_numbers = #tpu.dot_dimension_numbers<[1], [0], [0], [1], [0, 0, 1, 1], [], []>} : vector<48x128xbf16>, vector<128x128xbf16>, vector<48x128xf32> -> vector<48x128xf32>
    %23 = tpu.concatenate %10, %14, %18, %22 in 0 : vector<16x128xf32>, vector<16x128xf32>, vector<16x128xf32>, vector<48x128xf32> -> vector<96x128xf32>
    %24 = arith.truncf %23 : vector<96x128xf32> to vector<96x128xbf16>
    %c0_20 = arith.constant 0 : index
    %c0_21 = arith.constant 0 : index
    %25 = vector.load %arg3[%c0_20, %c0_21] : memref<256x96xbf16, #tpu.memory_space<vmem>>, vector<256x96xbf16>
    %cst_22 = arith.constant dense<0.000000e+00> : vector<256x128xf32>
    %26 = tpu.matmul %25, %24, %cst_22 {dimension_numbers = #tpu.dot_dimension_numbers<[1], [0], [0], [1], [0, 0, 1, 1], [], []>} : vector<256x96xbf16>, vector<96x128xbf16>, vector<256x128xf32> -> vector<256x128xf32>
    %27 = arith.addf %3, %26 : vector<256x128xf32>
    %c0_23 = arith.constant 0 : index
    %c0_24 = arith.constant 0 : index
    %28 = vector.load %arg6[%c0_23, %c0_24] : memref<1x128xf32, #tpu.memory_space<vmem>>, vector<1x128xf32>
    %29 = vector.broadcast %28 : vector<1x128xf32> to vector<256x128xf32>
    %30 = arith.addf %27, %29 : vector<256x128xf32>
    %c0_25 = arith.constant 0 : index
    %c0_26 = arith.constant 0 : index
    %c0_27 = arith.constant 0 : index
    %31 = vector.load %arg7[%c0_25, %c0_26, %c0_27] : memref<1x256x128xf32, #tpu.memory_space<vmem>>, vector<1x256x128xf32>
    %32 = vector.shape_cast %31 : vector<1x256x128xf32> to vector<256x128xf32>
    %33 = vector.shape_cast %30 : vector<256x128xf32> to vector<1x256x128xf32>
    tpu.vector_store %arg7[%c0_25, %c0_26, %c0_27], %33 {strides = array<i32>} : memref<1x256x128xf32, #tpu.memory_space<vmem>>, vector<1x256x128xf32>,
    return
  }
  func.func @transform_0(%arg0: i32) -> (i32, i32, i32) {
    %c0_i32 = arith.constant 0 : i32
    %c0_i32_0 = arith.constant 0 : i32
    %c0_i32_1 = arith.constant 0 : i32
    return %arg0, %c0_i32, %c0_i32_0 : i32, i32, i32
  }
  func.func @transform_1(%arg0: i32) -> (i32, i32) {
    %c0_i32 = arith.constant 0 : i32
    %c0_i32_0 = arith.constant 0 : i32
    %c0_i32_1 = arith.constant 0 : i32
    return %c0_i32, %c0_i32_0 : i32, i32
  }
  func.func @transform_2(%arg0: i32) -> (i32, i32) {
    %c0_i32 = arith.constant 0 : i32
    %c0_i32_0 = arith.constant 0 : i32
    %c0_i32_1 = arith.constant 0 : i32
    return %c0_i32, %c0_i32_0 : i32, i32
  }
  func.func @transform_3(%arg0: i32) -> (i32, i32) {
    %c0_i32 = arith.constant 0 : i32
    %c0_i32_0 = arith.constant 0 : i32
    %c0_i32_1 = arith.constant 0 : i32
    return %c0_i32, %c0_i32_0 : i32, i32
  }
  func.func @transform_4(%arg0: i32) -> (i32, i32, i32) {
    %c0_i32 = arith.constant 0 : i32
    %c0_i32_0 = arith.constant 0 : i32
    %c0_i32_1 = arith.constant 0 : i32
    %c0_i32_2 = arith.constant 0 : i32
    return %c0_i32, %c0_i32_0, %c0_i32_1 : i32, i32, i32
  }
  func.func @transform_5(%arg0: i32) -> (i32, i32) {
    %c0_i32 = arith.constant 0 : i32
    %c0_i32_0 = arith.constant 0 : i32
    %c0_i32_1 = arith.constant 0 : i32
    return %c0_i32, %c0_i32_0 : i32, i32
  }
  func.func @transform_6(%arg0: i32) -> (i32, i32, i32) {
    %c0_i32 = arith.constant 0 : i32
    %c0_i32_0 = arith.constant 0 : i32
    %c0_i32_1 = arith.constant 0 : i32
    return %arg0, %c0_i32, %c0_i32_0 : i32, i32, i32
  }
}

</mosaic_0001>

<llo_original>
// kernel: _lambda_.1
$region0: #{_lambda_.1}
  #allocation0 [shape = 'u32[]', space=smem, size = 0x4, offset = 0x4, fixed_abs, tag = 'smem constant byte address 0x4 - core index']
  #allocation1 [shape = 'u32[72,128]{1,0:T(1,128)}', space=vmem, size = 0x9000, scoped, tag = 'internal scratch']
  %s0 = inlined_call_operand.vmem [shape: bf16[2,256,128], index: 0, kind: input, shape index: {}]
  %s1 = inlined_call_operand.vmem [shape: bf16[96,256], index: 1, kind: input, shape index: {}]
  %s2 = inlined_call_operand.vmem [shape: bf16[256,96], index: 2, kind: input, shape index: {}]
  %s3 = inlined_call_operand.vmem [shape: bf16[128,128], index: 3, kind: input, shape index: {}]
  %s4 = inlined_call_operand.vmem [shape: bf16[4,128,128], index: 4, kind: input, shape index: {}]
  %s5 = inlined_call_operand.vmem [shape: f32[1,128], index: 5, kind: input, shape index: {}]
  %s6 = inlined_call_operand.hbm [shape: f32[2,256,128], index: 6, kind: output, shape index: {}]
  %s7 = sld [smem:[#allocation0]]
  $region57: #{_lambda_.1} parent=0
    _
  %s9 = ssub.s32 1, %s7
  %s10 = scalar_select 0, %s9, %s7
  $region1: #{_lambda_.1} parent=0
    #allocation2 [shape = 'u8[262144]{0}', space=vmem, size = 0x40000, scoped, tag = 'output window, operand 0']
    #allocation3 [shape = 's32[2]{0}', space=sflag, size = 0x8, scoped, tag = 'scoped memory for _lambda_.1']
    %11 = vsyncpa [#allocation3], 0
    %s12 = scalar_lea.sflag [#allocation3], 1
    %13 = vsyncpa %s12, 0
    loop: start=0, step=1, limit=4
    $region2: #{_lambda_.1} parent=1 // loop_pre_header
      _
    $region3: #{_lambda_.1} parent=1 // loop_header
      %s15 = sphi 0, %s19
      %p16 = scmp.ge.s32.totalorder %s15, 4
      %s25 = sphi 0, %s27
      %s28 = sphi 0, %s25
      %s29 = sphi 0, %s28
      %s45 = sphi 0, %s29
      %s49 = sphi 0, %s49
      %s51 = sphi 0, %s49
      %s52 = sphi 0, %s51
      %s66 = sphi 0, %s52
      %s70 = sphi 0, %s70
      %s72 = sphi 0, %s70
      %s73 = sphi 0, %s72
      %s87 = sphi 0, %s73
      %s91 = sphi 0, %s91
      %s93 = sphi 0, %s91
      %s94 = sphi 0, %s93
      %s108 = sphi 0, %s94
      %s112 = sphi 0, %s112
      %s114 = sphi 0, %s112
      %s115 = sphi 0, %s114
      %s129 = sphi 0, %s115
      %s133 = sphi 0, %s133
      %s135 = sphi 0, %s133
      %s136 = sphi 0, %s135
      %s150 = sphi 0, %s136
      %s156 = sphi 0, %s158
      %s159 = sphi 0, %s156
      %s160 = sphi 0, %s159
      %s176 = sphi 0, %s160
    $region4: #{_lambda_.1} parent=1 // loop_header_branch
      %18 = sbr.rel (%p16) target = $region8
    $region5: #{_lambda_.1} parent=1 // loop_body
      %s20 = ssub.s32 %s15, 1
      %s21 = ssub.s32 %s15, 2
      %s22 = sadd.s32 %s15, 1
      %s23 = ssub.s32 %s15, %s22
      %p24 = scmp.eq.s32.totalorder %s23, 0
      %s26 = sadd.s32 %s25, 1
      %s27 = scalar_select %p24, %s25, %s26
      %p30 = pneg %p24
      %p31 = scmp.eq.s32.totalorder %s15, 1
      %p32 = por %p30, %p31
      %p33 = scmp.ne.s32.totalorder %s25, %s28
      %p34 = scmp.eq.s32.totalorder %s15, 0
      %p35 = por %p33, %p34
      %p36 = scmp.ne.s32.totalorder %s25, %s28
      %p37 = scmp.eq.s32.totalorder %s20, 1
      %p38 = por %p36, %p37
      %p39 = scmp.ne.s32.totalorder %s28, %s29
      %p40 = scmp.eq.s32.totalorder %s20, 0
      %p41 = por %p39, %p40
      %p42 = scmp.ne.s32.totalorder %s28, %s29
      %p43 = scmp.eq.s32.totalorder %s21, 1
      %p44 = por %p42, %p43
      %p46 = scmp.ne.s32.totalorder %s29, %s45
      %p47 = scmp.eq.s32.totalorder %s21, 0
      %p48 = por %p46, %p47
      %s50 = sadd.s32 %s49, 1
      %p53 = scmp.eq.s32.totalorder %s15, 1
      %p54 = scmp.ne.s32.totalorder %s49, %s51
      %p55 = scmp.eq.s32.totalorder %s15, 0
      %p56 = por %p54, %p55
      %p57 = scmp.ne.s32.totalorder %s49, %s51
      %p58 = scmp.eq.s32.totalorder %s20, 1
      %p59 = por %p57, %p58
      %p60 = scmp.ne.s32.totalorder %s51, %s52
      %p61 = scmp.eq.s32.totalorder %s20, 0
      %p62 = por %p60, %p61
      %p63 = scmp.ne.s32.totalorder %s51, %s52
      %p64 = scmp.eq.s32.totalorder %s21, 1
      %p65 = por %p63, %p64
      %p67 = scmp.ne.s32.totalorder %s52, %s66
      %p68 = scmp.eq.s32.totalorder %s21, 0
      %p69 = por %p67, %p68
      %s71 = sadd.s32 %s70, 1
      %p74 = scmp.eq.s32.totalorder %s15, 1
      %p75 = scmp.ne.s32.totalorder %s70, %s72
      %p76 = scmp.eq.s32.totalorder %s15, 0
      %p77 = por %p75, %p76
      %p78 = scmp.ne.s32.totalorder %s70, %s72
      %p79 = scmp.eq.s32.totalorder %s20, 1
      %p80 = por %p78, %p79
      %p81 = scmp.ne.s32.totalorder %s72, %s73
      %p82 = scmp.eq.s32.totalorder %s20, 0
      %p83 = por %p81, %p82
      %p84 = scmp.ne.s32.totalorder %s72, %s73
      %p85 = scmp.eq.s32.totalorder %s21, 1
      %p86 = por %p84, %p85
      %p88 = scmp.ne.s32.totalorder %s73, %s87
      %p89 = scmp.eq.s32.totalorder %s21, 0
      %p90 = por %p88, %p89
      %s92 = sadd.s32 %s91, 1
      %p95 = scmp.eq.s32.totalorder %s15, 1
      %p96 = scmp.ne.s32.totalorder %s91, %s93
      %p97 = scmp.eq.s32.totalorder %s15, 0
      %p98 = por %p96, %p97
      %p99 = scmp.ne.s32.totalorder %s91, %s93
      %p100 = scmp.eq.s32.totalorder %s20, 1
      %p101 = por %p99, %p100
      %p102 = scmp.ne.s32.totalorder %s93, %s94
      %p103 = scmp.eq.s32.totalorder %s20, 0
      %p104 = por %p102, %p103
      %p105 = scmp.ne.s32.totalorder %s93, %s94
      %p106 = scmp.eq.s32.totalorder %s21, 1
      %p107 = por %p105, %p106
      %p109 = scmp.ne.s32.totalorder %s94, %s108
      %p110 = scmp.eq.s32.totalorder %s21, 0
      %p111 = por %p109, %p110
      %s113 = sadd.s32 %s112, 1
      %p116 = scmp.eq.s32.totalorder %s15, 1
      %p117 = scmp.ne.s32.totalorder %s112, %s114
      %p118 = scmp.eq.s32.totalorder %s15, 0
      %p119 = por %p117, %p118
      %p120 = scmp.ne.s32.totalorder %s112, %s114
      %p121 = scmp.eq.s32.totalorder %s20, 1
      %p122 = por %p120, %p121
      %p123 = scmp.ne.s32.totalorder %s114, %s115
      %p124 = scmp.eq.s32.totalorder %s20, 0
      %p125 = por %p123, %p124
      %p126 = scmp.ne.s32.totalorder %s114, %s115
      %p127 = scmp.eq.s32.totalorder %s21, 1
      %p128 = por %p126, %p127
      %p130 = scmp.ne.s32.totalorder %s115, %s129
      %p131 = scmp.eq.s32.totalorder %s21, 0
      %p132 = por %p130, %p131
      %s134 = sadd.s32 %s133, 1
      %p137 = scmp.eq.s32.totalorder %s15, 1
      %p138 = scmp.ne.s32.totalorder %s133, %s135
      %p139 = scmp.eq.s32.totalorder %s15, 0
      %p140 = por %p138, %p139
      %p141 = scmp.ne.s32.totalorder %s133, %s135
      %p142 = scmp.eq.s32.totalorder %s20, 1
      %p143 = por %p141, %p142
      %p144 = scmp.ne.s32.totalorder %s135, %s136
      %p145 = scmp.eq.s32.totalorder %s20, 0
      %p146 = por %p144, %p145
      %p147 = scmp.ne.s32.totalorder %s135, %s136
      %p148 = scmp.eq.s32.totalorder %s21, 1
      %p149 = por %p147, %p148
      %p151 = scmp.ne.s32.totalorder %s136, %s150
      %p152 = scmp.eq.s32.totalorder %s21, 0
      %p153 = por %p151, %p152
      %s154 = ssub.s32 %s15, %s22
      %p155 = scmp.eq.s32.totalorder %s154, 0
      %s157 = sadd.s32 %s156, 1
      %s158 = scalar_select %p155, %s156, %s157
      %p161 = pneg %p155
      %p162 = scmp.eq.s32.totalorder %s15, 1
      %p163 = por %p161, %p162
      %p164 = scmp.ne.s32.totalorder %s156, %s159
      %p165 = scmp.eq.s32.totalorder %s15, 0
      %p166 = por %p164, %p165
      %p167 = scmp.ne.s32.totalorder %s156, %s159
      %p168 = scmp.eq.s32.totalorder %s20, 1
      %p169 = por %p167, %p168
      %p170 = scmp.ne.s32.totalorder %s159, %s160
      %p171 = scmp.eq.s32.totalorder %s20, 0
      %p172 = por %p170, %p171
      %p173 = scmp.ne.s32.totalorder %s159, %s160
      %p174 = scmp.eq.s32.totalorder %s21, 1
      %p175 = por %p173, %p174
      %p177 = scmp.ne.s32.totalorder %s160, %s176
      %p178 = scmp.eq.s32.totalorder %s21, 0
      %p179 = por %p177, %p178
      %p180 = scmp.le.s32.totalorder 1, %s15
      %p181 = scmp.lt.s32.totalorder %s15, 3
      %p182 = pnand %p180, %p181
      %p183 = pneg %p182
      // Predicated region
      $region9: #{_lambda_.1} parent=5 // pred_check
        _
      $region10: #{_lambda_.1} parent=5 // pred_check_branch
        %185 = sbr.rel (%p182) target = $region12
      $region11: #{_lambda_.1} parent=5 // pred_region
        %s186 = ssub.s32 %s15, 1
        // Predicated region
        $region13: #{_lambda_.1} parent=11 // pred_check
          %p187 = pneg %p62
        $region14: #{_lambda_.1} parent=11 // pred_check_branch
          %189 = sbr.rel (%p187) target = $region16
        $region15: #{_lambda_.1} parent=11 // pred_region
          _
        $region16: #{_lambda_.1} parent=11 // pred_fallthru
          _
        // Predicated region
        $region17: #{_lambda_.1} parent=11 // pred_check
          %p190 = pneg %p83
        $region18: #{_lambda_.1} parent=11 // pred_check_branch
          %192 = sbr.rel (%p190) target = $region20
        $region19: #{_lambda_.1} parent=11 // pred_region
          _
        $region20: #{_lambda_.1} parent=11 // pred_fallthru
          _
        // Predicated region
        $region21: #{_lambda_.1} parent=11 // pred_check
          %p193 = pneg %p104
        $region22: #{_lambda_.1} parent=11 // pred_check_branch
          %195 = sbr.rel (%p193) target = $region24
        $region23: #{_lambda_.1} parent=11 // pred_region
          _
        $region24: #{_lambda_.1} parent=11 // pred_fallthru
          _
        // Predicated region
        $region25: #{_lambda_.1} parent=11 // pred_check
          %p196 = pneg %p125
        $region26: #{_lambda_.1} parent=11 // pred_check_branch
          %198 = sbr.rel (%p196) target = $region28
        $region27: #{_lambda_.1} parent=11 // pred_region
          _
        $region28: #{_lambda_.1} parent=11 // pred_fallthru
          _
        // Predicated region
        $region29: #{_lambda_.1} parent=11 // pred_check
          %p199 = pneg %p146
        $region30: #{_lambda_.1} parent=11 // pred_check_branch
          %201 = sbr.rel (%p199) target = $region32
        $region31: #{_lambda_.1} parent=11 // pred_region
          _
        $region32: #{_lambda_.1} parent=11 // pred_fallthru
          _
      $region12: #{_lambda_.1} parent=5 // pred_fallthru
        _
      %p202 = scmp.lt.s32.totalorder %s15, 2
      // Predicated region
      $region33: #{_lambda_.1} parent=5 // pred_check
        %p203 = pneg %p202
      $region34: #{_lambda_.1} parent=5 // pred_check_branch
        %205 = sbr.rel (%p203) target = $region36
      $region35: #{_lambda_.1} parent=5 // pred_region
        // Predicated region
        $region37: #{_lambda_.1} parent=35 // pred_check
          %p206 = pneg %p35
        $region38: #{_lambda_.1} parent=35 // pred_check_branch
          %208 = sbr.rel (%p206) target = $region40
        $region39: #{_lambda_.1} parent=35 // pred_region
          %p209 = scmp.lt.s32.totalorder %s15, 1
          %s210 = scalar_select %p209, %s15, 1
          %s211 = smul.addr %s210, 32
          %s212 = smul.addr %s211, 4
          %s213 = scalar_lea.vmem %s0, %s212
        $region40: #{_lambda_.1} parent=35 // pred_fallthru
          _
      $region36: #{_lambda_.1} parent=5 // pred_fallthru
        _
      %p214 = scmp.le.s32.totalorder 1, %s15
      %p215 = scmp.lt.s32.totalorder %s15, 3
      %p216 = pnand %p214, %p215
      %p217 = pneg %p216
      // Predicated region
      $region41: #{_lambda_.1} parent=5 // pred_check
        _
      $region42: #{_lambda_.1} parent=5 // pred_check_branch
        %219 = sbr.rel (%p216) target = $region44
      $region43: #{_lambda_.1} parent=5 // pred_region
        %s220 = ssub.s32 %s15, 1
        %p221 = scmp.lt.s32.totalorder %s20, 1
        %s222 = scalar_select %p221, %s20, 1
        %s223 = smul.addr %s222, 32
        %s224 = smul.addr %s223, 4
        %s225 = scalar_lea.vmem %s0, %s224
        %p226 = pneg %p41
        %p227 = pneg %p38
        %p228 = pneg %p62
        %p229 = pneg %p59
        %p230 = pneg %p83
        %p231 = pneg %p80
        %p232 = pneg %p104
        %p233 = pneg %p101
        %p234 = pneg %p125
        %p235 = pneg %p122
        %p236 = pneg %p146
        %p237 = pneg %p143
        %p238 = pneg %p172
        %p239 = pneg %p169
        %s240 = sand.u32 %s159, 1
        %s241 = scalar_lea.sflag [#allocation3], %s240
        %s242 = sand.u32 %s159, 1
        %s243 = smul.addr %s242, 256
        %s244 = scalar_lea.vmem [#allocation2], %s243
        %p245 = scmp.lt.s32.totalorder %s20, 1
        %s246 = scalar_select %p245, %s20, 1
        %s247 = smul.addr %s246, 32
        %s248 = smul.addr %s247, 4
        %s249 = scalar_lea.vmem %s0, %s248
        %v251 = vld [vmem:[%s249] sm:$0xf]
        %v252 = vld [vmem:[%s249 + $0x4] sm:$0xf]
        %v253 = vld [vmem:[%s249 + $0x8] sm:$0xf]
        %v254 = vld [vmem:[%s249 + $0xc] sm:$0xf]
        %v255 = vld [vmem:[%s249 + $0x10] sm:$0xf]
        %v256 = vld [vmem:[%s249 + $0x14] sm:$0xf]
        %v257 = vld [vmem:[%s249 + $0x18] sm:$0xf]
        %v258 = vld [vmem:[%s249 + $0x1c] sm:$0xf]
        %v259 = vld [vmem:[%s249 + $0x20] sm:$0xf]
        %v260 = vld [vmem:[%s249 + $0x24] sm:$0xf]
        %v261 = vld [vmem:[%s249 + $0x28] sm:$0xf]
        %v262 = vld [vmem:[%s249 + $0x2c] sm:$0xf]
        %v263 = vld [vmem:[%s249 + $0x30] sm:$0xf]
        %v264 = vld [vmem:[%s249 + $0x34] sm:$0xf]
        %v265 = vld [vmem:[%s249 + $0x38] sm:$0xf]
        %v266 = vld [vmem:[%s249 + $0x3c] sm:$0xf]
        %v267 = vld [vmem:[%s249 + $0x40] sm:$0xf]
        %v268 = vld [vmem:[%s249 + $0x44] sm:$0xf]
        %v269 = vld [vmem:[%s249 + $0x48] sm:$0xf]
        %v270 = vld [vmem:[%s249 + $0x4c] sm:$0xf]
        %v271 = vld [vmem:[%s249 + $0x50] sm:$0xf]
        %v272 = vld [vmem:[%s249 + $0x54] sm:$0xf]
        %v273 = vld [vmem:[%s249 + $0x58] sm:$0xf]
        %v274 = vld [vmem:[%s249 + $0x5c] sm:$0xf]
        %v275 = vld [vmem:[%s249 + $0x60] sm:$0xf]
        %v276 = vld [vmem:[%s249 + $0x64] sm:$0xf]
        %v277 = vld [vmem:[%s249 + $0x68] sm:$0xf]
        %v278 = vld [vmem:[%s249 + $0x6c] sm:$0xf]
        %v279 = vld [vmem:[%s249 + $0x70] sm:$0xf]
        %v280 = vld [vmem:[%s249 + $0x74] sm:$0xf]
        %v281 = vld [vmem:[%s249 + $0x78] sm:$0xf]
        %v282 = vld [vmem:[%s249 + $0x7c] sm:$0xf]
        %v283 = vld [vmem:[%s3] sm:$0xf]
        %v284 = vld [vmem:[%s3 + $0x4] sm:$0xf]
        %v285 = vld [vmem:[%s3 + $0x8] sm:$0xf]
        %v286 = vld [vmem:[%s3 + $0xc] sm:$0xf]
        %v287 = vld [vmem:[%s3 + $0x10] sm:$0xf]
        %v288 = vld [vmem:[%s3 + $0x14] sm:$0xf]
        %v289 = vld [vmem:[%s3 + $0x18] sm:$0xf]
        %v290 = vld [vmem:[%s3 + $0x1c] sm:$0xf]
        %v291 = vld [vmem:[%s3 + $0x20] sm:$0xf]
        %v292 = vld [vmem:[%s3 + $0x24] sm:$0xf]
        %v293 = vld [vmem:[%s3 + $0x28] sm:$0xf]
        %v294 = vld [vmem:[%s3 + $0x2c] sm:$0xf]
        %v295 = vld [vmem:[%s3 + $0x30] sm:$0xf]
        %v296 = vld [vmem:[%s3 + $0x34] sm:$0xf]
        %v297 = vld [vmem:[%s3 + $0x38] sm:$0xf]
        %v298 = vld [vmem:[%s3 + $0x3c] sm:$0xf]
        %v299 = vld [vmem:[%s1] sm:$0xff]
        %v300 = vld [vmem:[%s1 + $0x8] sm:$0xff]
        %v301 = vld [vmem:[%s1 + $0x10] sm:$0xff]
        %v302 = vld [vmem:[%s1 + $0x18] sm:$0xff]
        %v303 = vld [vmem:[%s1 + $0x20] sm:$0xff]
        %v304 = vld [vmem:[%s1 + $0x28] sm:$0xff]
        %v305 = vld [vmem:[%s1 + $0x30] sm:$0xff]
        %v306 = vld [vmem:[%s1 + $0x38] sm:$0xff]
        %v307 = vld [vmem:[%s1 + $0x40] sm:$0xff]
        %v308 = vld [vmem:[%s1 + $0x48] sm:$0xff]
        %v309 = vld [vmem:[%s1 + $0x50] sm:$0xff]
        %v310 = vld [vmem:[%s1 + $0x58] sm:$0xff]
        %v323 = vunpack.c.l.b16 %v299
        %v324 = vunpack.c.h.b16 %v299
        %v325 = vunpack.c.l.b16 %v300
        %v326 = vunpack.c.h.b16 %v300
        %v327 = vunpack.c.l.b16 %v301
        %v328 = vunpack.c.h.b16 %v301
        %v329 = vunpack.c.l.b16 %v302
        %v330 = vunpack.c.h.b16 %v302
        %v331 = vunpack.c.l.b16 %v303
        %v332 = vunpack.c.h.b16 %v303
        %v333 = vunpack.c.l.b16 %v304
        %v334 = vunpack.c.h.b16 %v304
        %v335 = vunpack.c.l.b16 %v305
        %v336 = vunpack.c.h.b16 %v305
        %v337 = vunpack.c.l.b16 %v306
        %v338 = vunpack.c.h.b16 %v306
        %v339 = vunpack.c.l.b16 %v307
        %v340 = vunpack.c.h.b16 %v307
        %v341 = vunpack.c.l.b16 %v308
        %v342 = vunpack.c.h.b16 %v308
        %v343 = vunpack.c.l.b16 %v309
        %v344 = vunpack.c.h.b16 %v309
        %v345 = vunpack.c.l.b16 %v310
        %v346 = vunpack.c.h.b16 %v310
        %v347 = vpack.c.b16 %v325, %v323
        %v348 = vpack.c.b16 %v326, %v324
        %v349 = vpack.c.b16 %v329, %v327
        %v350 = vpack.c.b16 %v330, %v328
        %v351 = vpack.c.b16 %v333, %v331
        %v352 = vpack.c.b16 %v334, %v332
        %v353 = vpack.c.b16 %v337, %v335
        %v354 = vpack.c.b16 %v338, %v336
        %v355 = vpack.c.b16 %v341, %v339
        %v356 = vpack.c.b16 %v342, %v340
        %v357 = vpack.c.b16 %v345, %v343
        %v358 = vpack.c.b16 %v346, %v344
        %v403 = vunpack.c.l.b16 %v251
        %v404 = vunpack.c.l.b16 %v252
        %v405 = vunpack.c.l.b16 %v253
        %v406 = vunpack.c.l.b16 %v254
        %v407 = vunpack.c.l.b16 %v255
        %v408 = vunpack.c.l.b16 %v256
        %v409 = vunpack.c.l.b16 %v257
        %v410 = vunpack.c.l.b16 %v258
        %v411 = vunpack.c.l.b16 %v259
        %v412 = vunpack.c.l.b16 %v260
        %v413 = vunpack.c.l.b16 %v261
        %v414 = vunpack.c.l.b16 %v262
        %v415 = vunpack.c.l.b16 %v263
        %v416 = vunpack.c.l.b16 %v264
        %v417 = vunpack.c.l.b16 %v265
        %v418 = vunpack.c.l.b16 %v266
        %v419 = vunpack.c.l.b16 %v267
        %v420 = vunpack.c.l.b16 %v268
        %v421 = vunpack.c.l.b16 %v269
        %v422 = vunpack.c.l.b16 %v270
        %v423 = vunpack.c.l.b16 %v271
        %v424 = vunpack.c.l.b16 %v272
        %v425 = vunpack.c.l.b16 %v273
        %v426 = vunpack.c.l.b16 %v274
        %v427 = vunpack.c.l.b16 %v275
        %v428 = vunpack.c.l.b16 %v276
        %v429 = vunpack.c.l.b16 %v277
        %v430 = vunpack.c.l.b16 %v278
        %v431 = vunpack.c.l.b16 %v279
        %v432 = vunpack.c.l.b16 %v280
        %v433 = vunpack.c.l.b16 %v281
        %v434 = vunpack.c.l.b16 %v282
        %v435 = vpack.c.b16 %v404, %v403
        %v436 = vpack.c.b16 %v406, %v405
        %v437 = vpack.c.b16 %v408, %v407
        %v438 = vpack.c.b16 %v410, %v409
        %v439 = vpack.c.b16 %v412, %v411
        %v440 = vpack.c.b16 %v414, %v413
        %v441 = vpack.c.b16 %v416, %v415
        %v442 = vpack.c.b16 %v418, %v417
        %v443 = vpack.c.b16 %v420, %v419
        %v444 = vpack.c.b16 %v422, %v421
        %v445 = vpack.c.b16 %v424, %v423
        %v446 = vpack.c.b16 %v426, %v425
        %v447 = vpack.c.b16 %v428, %v427
        %v448 = vpack.c.b16 %v430, %v429
        %v449 = vpack.c.b16 %v432, %v431
        %v450 = vpack.c.b16 %v434, %v433
        %467 = vmatpush.bf16.msra.mxu0 %v442
        %468 = vmatpush.bf16.msra.mxu0 %v441
        %469 = vmatpush.bf16.msra.mxu0 %v440
        %470 = vmatpush.bf16.msra.mxu0 %v439
        %471 = vmatpush.bf16.msra.mxu0 %v438
        %472 = vmatpush.bf16.msra.mxu0 %v437
        %473 = vmatpush.bf16.msra.mxu0 %v436
        %474 = vmatpush.bf16.msra.mxu0 %v435
        %475 = vmatmul.bf16.gmra.mxu0 %v347
        %v476 = vpop.f32.mrf.mxu0
        %v477 = vadd.f32 0.0, %v476
        %v478 = vpop.f32.mrf.mxu0
        %v479 = vadd.f32 0.0, %v478
        %480 = vmatmul.bf16.gmra.mxu0 %v349
        %v481 = vpop.f32.mrf.mxu0
        %v482 = vadd.f32 0.0, %v481
        %v483 = vpop.f32.mrf.mxu0
        %v484 = vadd.f32 0.0, %v483
        %485 = vmatmul.bf16.gmra.mxu0 %v351
        %v486 = vpop.f32.mrf.mxu0
        %v487 = vadd.f32 0.0, %v486
        %v488 = vpop.f32.mrf.mxu0
        %v489 = vadd.f32 0.0, %v488
        %490 = vmatmul.bf16.gmra.mxu0 %v353
        %v491 = vpop.f32.mrf.mxu0
        %v492 = vadd.f32 0.0, %v491
        %v493 = vpop.f32.mrf.mxu0
        %v494 = vadd.f32 0.0, %v493
        %495 = vmatmul.bf16.gmra.mxu0 %v355
        %v496 = vpop.f32.mrf.mxu0
        %v497 = vadd.f32 0.0, %v496
        %v498 = vpop.f32.mrf.mxu0
        %v499 = vadd.f32 0.0, %v498
        %500 = vmatmul.bf16.gmra.mxu0 %v357
        %v501 = vpop.f32.mrf.mxu0
        %v502 = vadd.f32 0.0, %v501
        %v503 = vpop.f32.mrf.mxu0
        %v504 = vadd.f32 0.0, %v503
        %505 = vdwg.mxu0
        %506 = vmatpush.bf16.msra.mxu0 %v450
        %507 = vmatpush.bf16.msra.mxu0 %v449
        %508 = vmatpush.bf16.msra.mxu0 %v448
        %509 = vmatpush.bf16.msra.mxu0 %v447
        %510 = vmatpush.bf16.msra.mxu0 %v446
        %511 = vmatpush.bf16.msra.mxu0 %v445
        %512 = vmatpush.bf16.msra.mxu0 %v444
        %513 = vmatpush.bf16.msra.mxu0 %v443
        %514 = vmatmul.bf16.gmra.mxu0 %v348
        %v515 = vpop.f32.mrf.mxu0
        %v516 = vadd.f32 %v477, %v515
        %v517 = vpop.f32.mrf.mxu0
        %v518 = vadd.f32 %v479, %v517
        %519 = vmatmul.bf16.gmra.mxu0 %v350
        %v520 = vpop.f32.mrf.mxu0
        %v521 = vadd.f32 %v482, %v520
        %v522 = vpop.f32.mrf.mxu0
        %v523 = vadd.f32 %v484, %v522
        %524 = vmatmul.bf16.gmra.mxu0 %v352
        %v525 = vpop.f32.mrf.mxu0
        %v526 = vadd.f32 %v487, %v525
        %v527 = vpop.f32.mrf.mxu0
        %v528 = vadd.f32 %v489, %v527
        %529 = vmatmul.bf16.gmra.mxu0 %v354
        %v530 = vpop.f32.mrf.mxu0
        %v531 = vadd.f32 %v492, %v530
        %v532 = vpop.f32.mrf.mxu0
        %v533 = vadd.f32 %v494, %v532
        %534 = vmatmul.bf16.gmra.mxu0 %v356
        %v535 = vpop.f32.mrf.mxu0
        %v536 = vadd.f32 %v497, %v535
        %v537 = vpop.f32.mrf.mxu0
        %v538 = vadd.f32 %v499, %v537
        %539 = vmatmul.bf16.gmra.mxu0 %v358
        %v540 = vpop.f32.mrf.mxu0
        %v541 = vadd.f32 %v502, %v540
        %v542 = vpop.f32.mrf.mxu0
        %v543 = vadd.f32 %v504, %v542
        %544 = vdwg.mxu0
        %v545 = vpack.c.bf16 %v516, %v516
        %v546 = vpack.c.bf16 %v518, %v518
        %v547 = vpack.c.bf16 %v521, %v521
        %v548 = vpack.c.bf16 %v523, %v523
        %v549 = vpack.c.bf16 %v526, %v526
        %v550 = vpack.c.bf16 %v528, %v528
        %v551 = vpack.c.bf16 %v531, %v531
        %v552 = vpack.c.bf16 %v533, %v533
        %v553 = vpack.c.bf16 %v536, %v536
        %v554 = vpack.c.bf16 %v538, %v538
        %v555 = vpack.c.bf16 %v541, %v541
        %v556 = vpack.c.bf16 %v543, %v543
        %v557 = vld [vmem:[%s4] sm:$0xf]
        %v558 = vld [vmem:[%s4 + $0x4] sm:$0xf]
        %v559 = vld [vmem:[%s4 + $0x8] sm:$0xf]
        %v560 = vld [vmem:[%s4 + $0xc] sm:$0xf]
        %v561 = vld [vmem:[%s4 + $0x10] sm:$0xf]
        %v562 = vld [vmem:[%s4 + $0x14] sm:$0xf]
        %v563 = vld [vmem:[%s4 + $0x18] sm:$0xf]
        %v564 = vld [vmem:[%s4 + $0x1c] sm:$0xf]
        %v565 = vld [vmem:[%s4 + $0x20] sm:$0xf]
        %v566 = vld [vmem:[%s4 + $0x24] sm:$0xf]
        %v567 = vld [vmem:[%s4 + $0x28] sm:$0xf]
        %v568 = vld [vmem:[%s4 + $0x2c] sm:$0xf]
        %v569 = vld [vmem:[%s4 + $0x30] sm:$0xf]
        %v570 = vld [vmem:[%s4 + $0x34] sm:$0xf]
        %v571 = vld [vmem:[%s4 + $0x38] sm:$0xf]
        %v572 = vld [vmem:[%s4 + $0x3c] sm:$0xf]
        %v575 = vunpack.c.l.b16 %v545
        %v576 = vunpack.c.l.b16 %v546
        %v577 = vpack.c.b16 %v576, %v575
        %v595 = vunpack.c.l.b16 %v557
        %v596 = vunpack.c.l.b16 %v558
        %v597 = vunpack.c.l.b16 %v559
        %v598 = vunpack.c.l.b16 %v560
        %v599 = vunpack.c.l.b16 %v561
        %v600 = vunpack.c.l.b16 %v562
        %v601 = vunpack.c.l.b16 %v563
        %v602 = vunpack.c.l.b16 %v564
        %v603 = vunpack.c.l.b16 %v565
        %v604 = vunpack.c.l.b16 %v566
        %v605 = vunpack.c.l.b16 %v567
        %v606 = vunpack.c.l.b16 %v568
        %v607 = vunpack.c.l.b16 %v569
        %v608 = vunpack.c.l.b16 %v570
        %v609 = vunpack.c.l.b16 %v571
        %v610 = vunpack.c.l.b16 %v572
        %v611 = vpack.c.b16 %v596, %v595
        %v612 = vpack.c.b16 %v598, %v597
        %v613 = vpack.c.b16 %v600, %v599
        %v614 = vpack.c.b16 %v602, %v601
        %v615 = vpack.c.b16 %v604, %v603
        %v616 = vpack.c.b16 %v606, %v605
        %v617 = vpack.c.b16 %v608, %v607
        %v618 = vpack.c.b16 %v610, %v609
        %627 = vmatpush.bf16.msra.mxu0 %v618
        %628 = vmatpush.bf16.msra.mxu0 %v617
        %629 = vmatpush.bf16.msra.mxu0 %v616
        %630 = vmatpush.bf16.msra.mxu0 %v615
        %631 = vmatpush.bf16.msra.mxu0 %v614
        %632 = vmatpush.bf16.msra.mxu0 %v613
        %633 = vmatpush.bf16.msra.mxu0 %v612
        %634 = vmatpush.bf16.msra.mxu0 %v611
        %635 = vmatmul.bf16.gmra.mxu0 %v577
        %v636 = vpop.f32.mrf.mxu0
        %v637 = vadd.f32 0.0, %v636
        %v638 = vpop.f32.mrf.mxu0
        %v639 = vadd.f32 0.0, %v638
        %640 = vdwg.mxu0
        %s641 = scalar_lea.vmem %s4, 64
        %v642 = vld [vmem:[%s641] sm:$0xf]
        %v643 = vld [vmem:[%s641 + $0x4] sm:$0xf]
        %v644 = vld [vmem:[%s641 + $0x8] sm:$0xf]
        %v645 = vld [vmem:[%s641 + $0xc] sm:$0xf]
        %v646 = vld [vmem:[%s641 + $0x10] sm:$0xf]
        %v647 = vld [vmem:[%s641 + $0x14] sm:$0xf]
        %v648 = vld [vmem:[%s641 + $0x18] sm:$0xf]
        %v649 = vld [vmem:[%s641 + $0x1c] sm:$0xf]
        %v650 = vld [vmem:[%s641 + $0x20] sm:$0xf]
        %v651 = vld [vmem:[%s641 + $0x24] sm:$0xf]
        %v652 = vld [vmem:[%s641 + $0x28] sm:$0xf]
        %v653 = vld [vmem:[%s641 + $0x2c] sm:$0xf]
        %v654 = vld [vmem:[%s641 + $0x30] sm:$0xf]
        %v655 = vld [vmem:[%s641 + $0x34] sm:$0xf]
        %v656 = vld [vmem:[%s641 + $0x38] sm:$0xf]
        %v657 = vld [vmem:[%s641 + $0x3c] sm:$0xf]
        %v660 = vunpack.c.l.b16 %v547
        %v661 = vunpack.c.l.b16 %v548
        %v662 = vpack.c.b16 %v661, %v660
        %v680 = vunpack.c.l.b16 %v642
        %v681 = vunpack.c.l.b16 %v643
        %v682 = vunpack.c.l.b16 %v644
        %v683 = vunpack.c.l.b16 %v645
        %v684 = vunpack.c.l.b16 %v646
        %v685 = vunpack.c.l.b16 %v647
        %v686 = vunpack.c.l.b16 %v648
        %v687 = vunpack.c.l.b16 %v649
        %v688 = vunpack.c.l.b16 %v650
        %v689 = vunpack.c.l.b16 %v651
        %v690 = vunpack.c.l.b16 %v652
        %v691 = vunpack.c.l.b16 %v653
        %v692 = vunpack.c.l.b16 %v654
        %v693 = vunpack.c.l.b16 %v655
        %v694 = vunpack.c.l.b16 %v656
        %v695 = vunpack.c.l.b16 %v657
        %v696 = vpack.c.b16 %v681, %v680
        %v697 = vpack.c.b16 %v683, %v682
        %v698 = vpack.c.b16 %v685, %v684
        %v699 = vpack.c.b16 %v687, %v686
        %v700 = vpack.c.b16 %v689, %v688
        %v701 = vpack.c.b16 %v691, %v690
        %v702 = vpack.c.b16 %v693, %v692
        %v703 = vpack.c.b16 %v695, %v694
        %712 = vmatpush.bf16.msra.mxu0 %v703
        %713 = vmatpush.bf16.msra.mxu0 %v702
        %714 = vmatpush.bf16.msra.mxu0 %v701
        %715 = vmatpush.bf16.msra.mxu0 %v700
        %716 = vmatpush.bf16.msra.mxu0 %v699
        %717 = vmatpush.bf16.msra.mxu0 %v698
        %718 = vmatpush.bf16.msra.mxu0 %v697
        %719 = vmatpush.bf16.msra.mxu0 %v696
        %720 = vmatmul.bf16.gmra.mxu0 %v662
        %v721 = vpop.f32.mrf.mxu0
        %v722 = vadd.f32 0.0, %v721
        %v723 = vpop.f32.mrf.mxu0
        %v724 = vadd.f32 0.0, %v723
        %725 = vdwg.mxu0
        %s726 = scalar_lea.vmem %s4, 128
        %v727 = vld [vmem:[%s726] sm:$0xf]
        %v728 = vld [vmem:[%s726 + $0x4] sm:$0xf]
        %v729 = vld [vmem:[%s726 + $0x8] sm:$0xf]
        %v730 = vld [vmem:[%s726 + $0xc] sm:$0xf]
        %v731 = vld [vmem:[%s726 + $0x10] sm:$0xf]
        %v732 = vld [vmem:[%s726 + $0x14] sm:$0xf]
        %v733 = vld [vmem:[%s726 + $0x18] sm:$0xf]
        %v734 = vld [vmem:[%s726 + $0x1c] sm:$0xf]
        %v735 = vld [vmem:[%s726 + $0x20] sm:$0xf]
        %v736 = vld [vmem:[%s726 + $0x24] sm:$0xf]
        %v737 = vld [vmem:[%s726 + $0x28] sm:$0xf]
        %v738 = vld [vmem:[%s726 + $0x2c] sm:$0xf]
        %v739 = vld [vmem:[%s726 + $0x30] sm:$0xf]
        %v740 = vld [vmem:[%s726 + $0x34] sm:$0xf]
        %v741 = vld [vmem:[%s726 + $0x38] sm:$0xf]
        %v742 = vld [vmem:[%s726 + $0x3c] sm:$0xf]
        %v745 = vunpack.c.l.b16 %v549
        %v746 = vunpack.c.l.b16 %v550
        %v747 = vpack.c.b16 %v746, %v745
        %v765 = vunpack.c.l.b16 %v727
        %v766 = vunpack.c.l.b16 %v728
        %v767 = vunpack.c.l.b16 %v729
        %v768 = vunpack.c.l.b16 %v730
        %v769 = vunpack.c.l.b16 %v731
        %v770 = vunpack.c.l.b16 %v732
        %v771 = vunpack.c.l.b16 %v733
        %v772 = vunpack.c.l.b16 %v734
        %v773 = vunpack.c.l.b16 %v735
        %v774 = vunpack.c.l.b16 %v736
        %v775 = vunpack.c.l.b16 %v737
        %v776 = vunpack.c.l.b16 %v738
        %v777 = vunpack.c.l.b16 %v739
        %v778 = vunpack.c.l.b16 %v740
        %v779 = vunpack.c.l.b16 %v741
        %v780 = vunpack.c.l.b16 %v742
        %v781 = vpack.c.b16 %v766, %v765
        %v782 = vpack.c.b16 %v768, %v767
        %v783 = vpack.c.b16 %v770, %v769
        %v784 = vpack.c.b16 %v772, %v771
        %v785 = vpack.c.b16 %v774, %v773
        %v786 = vpack.c.b16 %v776, %v775
        %v787 = vpack.c.b16 %v778, %v777
        %v788 = vpack.c.b16 %v780, %v779
        %797 = vmatpush.bf16.msra.mxu0 %v788
        %798 = vmatpush.bf16.msra.mxu0 %v787
        %799 = vmatpush.bf16.msra.mxu0 %v786
        %800 = vmatpush.bf16.msra.mxu0 %v785
        %801 = vmatpush.bf16.msra.mxu0 %v784
        %802 = vmatpush.bf16.msra.mxu0 %v783
        %803 = vmatpush.bf16.msra.mxu0 %v782
        %804 = vmatpush.bf16.msra.mxu0 %v781
        %805 = vmatmul.bf16.gmra.mxu0 %v747
        %v806 = vpop.f32.mrf.mxu0
        %v807 = vadd.f32 0.0, %v806
        %v808 = vpop.f32.mrf.mxu0
        %v809 = vadd.f32 0.0, %v808
        %810 = vdwg.mxu0
        %s811 = scalar_lea.vmem %s4, 192
        %v812 = vld [vmem:[%s811] sm:$0xf]
        %v813 = vld [vmem:[%s811 + $0x4] sm:$0xf]
        %v814 = vld [vmem:[%s811 + $0x8] sm:$0xf]
        %v815 = vld [vmem:[%s811 + $0xc] sm:$0xf]
        %v816 = vld [vmem:[%s811 + $0x10] sm:$0xf]
        %v817 = vld [vmem:[%s811 + $0x14] sm:$0xf]
        %v818 = vld [vmem:[%s811 + $0x18] sm:$0xf]
        %v819 = vld [vmem:[%s811 + $0x1c] sm:$0xf]
        %v820 = vld [vmem:[%s811 + $0x20] sm:$0xf]
        %v821 = vld [vmem:[%s811 + $0x24] sm:$0xf]
        %v822 = vld [vmem:[%s811 + $0x28] sm:$0xf]
        %v823 = vld [vmem:[%s811 + $0x2c] sm:$0xf]
        %v824 = vld [vmem:[%s811 + $0x30] sm:$0xf]
        %v825 = vld [vmem:[%s811 + $0x34] sm:$0xf]
        %v826 = vld [vmem:[%s811 + $0x38] sm:$0xf]
        %v827 = vld [vmem:[%s811 + $0x3c] sm:$0xf]
        %v834 = vunpack.c.l.b16 %v551
        %v835 = vunpack.c.l.b16 %v552
        %v836 = vunpack.c.l.b16 %v553
        %v837 = vunpack.c.l.b16 %v554
        %v838 = vunpack.c.l.b16 %v555
        %v839 = vunpack.c.l.b16 %v556
        %v840 = vpack.c.b16 %v835, %v834
        %v841 = vpack.c.b16 %v837, %v836
        %v842 = vpack.c.b16 %v839, %v838
        %v862 = vunpack.c.l.b16 %v812
        %v863 = vunpack.c.l.b16 %v813
        %v864 = vunpack.c.l.b16 %v814
        %v865 = vunpack.c.l.b16 %v815
        %v866 = vunpack.c.l.b16 %v816
        %v867 = vunpack.c.l.b16 %v817
        %v868 = vunpack.c.l.b16 %v818
        %v869 = vunpack.c.l.b16 %v819
        %v870 = vunpack.c.l.b16 %v820
        %v871 = vunpack.c.l.b16 %v821
        %v872 = vunpack.c.l.b16 %v822
        %v873 = vunpack.c.l.b16 %v823
        %v874 = vunpack.c.l.b16 %v824
        %v875 = vunpack.c.l.b16 %v825
        %v876 = vunpack.c.l.b16 %v826
        %v877 = vunpack.c.l.b16 %v827
        %v878 = vpack.c.b16 %v863, %v862
        %v879 = vpack.c.b16 %v865, %v864
        %v880 = vpack.c.b16 %v867, %v866
        %v881 = vpack.c.b16 %v869, %v868
        %v882 = vpack.c.b16 %v871, %v870
        %v883 = vpack.c.b16 %v873, %v872
        %v884 = vpack.c.b16 %v875, %v874
        %v885 = vpack.c.b16 %v877, %v876
        %894 = vmatpush.bf16.msra.mxu0 %v885
        %895 = vmatpush.bf16.msra.mxu0 %v884
        %896 = vmatpush.bf16.msra.mxu0 %v883
        %897 = vmatpush.bf16.msra.mxu0 %v882
        %898 = vmatpush.bf16.msra.mxu0 %v881
        %899 = vmatpush.bf16.msra.mxu0 %v880
        %900 = vmatpush.bf16.msra.mxu0 %v879
        %901 = vmatpush.bf16.msra.mxu0 %v878
        %902 = vmatmul.bf16.gmra.mxu0 %v840
        %v903 = vpop.f32.mrf.mxu0
        %v904 = vadd.f32 0.0, %v903
        %v905 = vpop.f32.mrf.mxu0
        %v906 = vadd.f32 0.0, %v905
        %907 = vmatmul.bf16.gmra.mxu0 %v841
        %v908 = vpop.f32.mrf.mxu0
        %v909 = vadd.f32 0.0, %v908
        %v910 = vpop.f32.mrf.mxu0
        %v911 = vadd.f32 0.0, %v910
        %912 = vmatmul.bf16.gmra.mxu0 %v842
        %v913 = vpop.f32.mrf.mxu0
        %v914 = vadd.f32 0.0, %v913
        %v915 = vpop.f32.mrf.mxu0
        %v916 = vadd.f32 0.0, %v915
        %917 = vdwg.mxu0
        %v918 = vpack.c.bf16 %v639, %v637
        %v919 = vpack.c.bf16 %v724, %v722
        %v920 = vpack.c.bf16 %v809, %v807
        %v921 = vpack.c.bf16 %v906, %v904
        %v922 = vpack.c.bf16 %v911, %v909
        %v923 = vpack.c.bf16 %v916, %v914
        %v924 = vld [vmem:[%s2] sm:$0xf]
        %v925 = vld [vmem:[%s2 + $0x4] sm:$0xf]
        %v926 = vld [vmem:[%s2 + $0x8] sm:$0xf]
        %v927 = vld [vmem:[%s2 + $0xc] sm:$0xf]
        %v928 = vld [vmem:[%s2 + $0x10] sm:$0xf]
        %v929 = vld [vmem:[%s2 + $0x14] sm:$0xf]
        %v930 = vld [vmem:[%s2 + $0x18] sm:$0xf]
        %v931 = vld [vmem:[%s2 + $0x1c] sm:$0xf]
        %v932 = vld [vmem:[%s2 + $0x20] sm:$0xf]
        %v933 = vld [vmem:[%s2 + $0x24] sm:$0xf]
        %v934 = vld [vmem:[%s2 + $0x28] sm:$0xf]
        %v935 = vld [vmem:[%s2 + $0x2c] sm:$0xf]
        %v936 = vld [vmem:[%s2 + $0x30] sm:$0xf]
        %v937 = vld [vmem:[%s2 + $0x34] sm:$0xf]
        %v938 = vld [vmem:[%s2 + $0x38] sm:$0xf]
        %v939 = vld [vmem:[%s2 + $0x3c] sm:$0xf]
        %v940 = vld [vmem:[%s2 + $0x40] sm:$0xf]
        %v941 = vld [vmem:[%s2 + $0x44] sm:$0xf]
        %v942 = vld [vmem:[%s2 + $0x48] sm:$0xf]
        %v943 = vld [vmem:[%s2 + $0x4c] sm:$0xf]
        %v944 = vld [vmem:[%s2 + $0x50] sm:$0xf]
        %v945 = vld [vmem:[%s2 + $0x54] sm:$0xf]
        %v946 = vld [vmem:[%s2 + $0x58] sm:$0xf]
        %v947 = vld [vmem:[%s2 + $0x5c] sm:$0xf]
        %v948 = vld [vmem:[%s2 + $0x60] sm:$0xf]
        %v949 = vld [vmem:[%s2 + $0x64] sm:$0xf]
        %v950 = vld [vmem:[%s2 + $0x68] sm:$0xf]
        %v951 = vld [vmem:[%s2 + $0x6c] sm:$0xf]
        %v952 = vld [vmem:[%s2 + $0x70] sm:$0xf]
        %v953 = vld [vmem:[%s2 + $0x74] sm:$0xf]
        %v954 = vld [vmem:[%s2 + $0x78] sm:$0xf]
        %v955 = vld [vmem:[%s2 + $0x7c] sm:$0xf]
        %v988 = vunpack.c.l.b16 %v924
        %v989 = vunpack.c.l.b16 %v925
        %v990 = vunpack.c.l.b16 %v926
        %v991 = vunpack.c.l.b16 %v927
        %v992 = vunpack.c.l.b16 %v928
        %v993 = vunpack.c.l.b16 %v929
        %v994 = vunpack.c.l.b16 %v930
        %v995 = vunpack.c.l.b16 %v931
        %v996 = vunpack.c.l.b16 %v932
        %v997 = vunpack.c.l.b16 %v933
        %v998 = vunpack.c.l.b16 %v934
        %v999 = vunpack.c.l.b16 %v935
        %v1000 = vunpack.c.l.b16 %v936
        %v1001 = vunpack.c.l.b16 %v937
        %v1002 = vunpack.c.l.b16 %v938
        %v1003 = vunpack.c.l.b16 %v939
        %v1004 = vunpack.c.l.b16 %v940
        %v1005 = vunpack.c.l.b16 %v941
        %v1006 = vunpack.c.l.b16 %v942
        %v1007 = vunpack.c.l.b16 %v943
        %v1008 = vunpack.c.l.b16 %v944
        %v1009 = vunpack.c.l.b16 %v945
        %v1010 = vunpack.c.l.b16 %v946
        %v1011 = vunpack.c.l.b16 %v947
        %v1012 = vunpack.c.l.b16 %v948
        %v1013 = vunpack.c.l.b16 %v949
        %v1014 = vunpack.c.l.b16 %v950
        %v1015 = vunpack.c.l.b16 %v951
        %v1016 = vunpack.c.l.b16 %v952
        %v1017 = vunpack.c.l.b16 %v953
        %v1018 = vunpack.c.l.b16 %v954
        %v1019 = vunpack.c.l.b16 %v955
        %v1020 = vpack.c.b16 %v989, %v988
        %v1021 = vpack.c.b16 %v991, %v990
        %v1022 = vpack.c.b16 %v993, %v992
        %v1023 = vpack.c.b16 %v995, %v994
        %v1024 = vpack.c.b16 %v997, %v996
        %v1025 = vpack.c.b16 %v999, %v998
        %v1026 = vpack.c.b16 %v1001, %v1000
        %v1027 = vpack.c.b16 %v1003, %v1002
        %v1028 = vpack.c.b16 %v1005, %v1004
        %v1029 = vpack.c.b16 %v1007, %v1006
        %v1030 = vpack.c.b16 %v1009, %v1008
        %v1031 = vpack.c.b16 %v1011, %v1010
        %v1032 = vpack.c.b16 %v1013, %v1012
        %v1033 = vpack.c.b16 %v1015, %v1014
        %v1034 = vpack.c.b16 %v1017, %v1016
        %v1035 = vpack.c.b16 %v1019, %v1018
        %vm1036 = vcmask 785408
        %v1038 = vsel %vm1036, %v1020, 0
        %v1041 = vsel %vm1036, %v1021, 0
        %v1044 = vsel %vm1036, %v1022, 0
        %v1047 = vsel %vm1036, %v1023, 0
        %v1050 = vsel %vm1036, %v1024, 0
        %v1053 = vsel %vm1036, %v1025, 0
        %v1056 = vsel %vm1036, %v1026, 0
        %v1059 = vsel %vm1036, %v1027, 0
        %v1062 = vsel %vm1036, %v1028, 0
        %v1065 = vsel %vm1036, %v1029, 0
        %v1068 = vsel %vm1036, %v1030, 0
        %v1071 = vsel %vm1036, %v1031, 0
        %v1074 = vsel %vm1036, %v1032, 0
        %v1077 = vsel %vm1036, %v1033, 0
        %v1080 = vsel %vm1036, %v1034, 0
        %v1083 = vsel %vm1036, %v1035, 0
        %1085 = vmatpush.bf16.msra.mxu0 0
        %1086 = vmatpush.bf16.msra.mxu0 0
        %1087 = vmatpush.bf16.msra.mxu0 %v923
        %1088 = vmatpush.bf16.msra.mxu0 %v922
        %1089 = vmatpush.bf16.msra.mxu0 %v921
        %1090 = vmatpush.bf16.msra.mxu0 %v920
        %1091 = vmatpush.bf16.msra.mxu0 %v919
        %1092 = vmatpush.bf16.msra.mxu0 %v918
        %1093 = vmatmul.bf16.gmra.mxu0 %v1038
        %v1094 = vpop.f32.mrf.mxu0
        %v1095 = vadd.f32 0.0, %v1094
        %v1096 = vpop.f32.mrf.mxu0
        %v1097 = vadd.f32 0.0, %v1096
        %1098 = vmatmul.bf16.gmra.mxu0 %v1041
        %v1099 = vpop.f32.mrf.mxu0
        %v1100 = vadd.f32 0.0, %v1099
        %v1101 = vpop.f32.mrf.mxu0
        %v1102 = vadd.f32 0.0, %v1101
        %1103 = vmatmul.bf16.gmra.mxu0 %v1044
        %v1104 = vpop.f32.mrf.mxu0
        %v1105 = vadd.f32 0.0, %v1104
        %v1106 = vpop.f32.mrf.mxu0
        %v1107 = vadd.f32 0.0, %v1106
        %1108 = vmatmul.bf16.gmra.mxu0 %v1047
        %v1109 = vpop.f32.mrf.mxu0
        %v1110 = vadd.f32 0.0, %v1109
        %v1111 = vpop.f32.mrf.mxu0
        %v1112 = vadd.f32 0.0, %v1111
        %1113 = vmatmul.bf16.gmra.mxu0 %v1050
        %v1114 = vpop.f32.mrf.mxu0
        %v1115 = vadd.f32 0.0, %v1114
        %v1116 = vpop.f32.mrf.mxu0
        %v1117 = vadd.f32 0.0, %v1116
        %1118 = vmatmul.bf16.gmra.mxu0 %v1053
        %v1119 = vpop.f32.mrf.mxu0
        %v1120 = vadd.f32 0.0, %v1119
        %v1121 = vpop.f32.mrf.mxu0
        %v1122 = vadd.f32 0.0, %v1121
        %1123 = vmatmul.bf16.gmra.mxu0 %v1056
        %v1124 = vpop.f32.mrf.mxu0
        %v1125 = vadd.f32 0.0, %v1124
        %v1126 = vpop.f32.mrf.mxu0
        %v1127 = vadd.f32 0.0, %v1126
        %1128 = vmatmul.bf16.gmra.mxu0 %v1059
        %v1129 = vpop.f32.mrf.mxu0
        %v1130 = vadd.f32 0.0, %v1129
        %v1131 = vpop.f32.mrf.mxu0
        %v1132 = vadd.f32 0.0, %v1131
        %1133 = vmatmul.bf16.gmra.mxu0 %v1062
        %v1134 = vpop.f32.mrf.mxu0
        %v1135 = vadd.f32 0.0, %v1134
        %v1136 = vpop.f32.mrf.mxu0
        %v1137 = vadd.f32 0.0, %v1136
        %1138 = vmatmul.bf16.gmra.mxu0 %v1065
        %v1139 = vpop.f32.mrf.mxu0
        %v1140 = vadd.f32 0.0, %v1139
        %v1141 = vpop.f32.mrf.mxu0
        %v1142 = vadd.f32 0.0, %v1141
        %1143 = vmatmul.bf16.gmra.mxu0 %v1068
        %v1144 = vpop.f32.mrf.mxu0
        %v1145 = vadd.f32 0.0, %v1144
        %v1146 = vpop.f32.mrf.mxu0
        %v1147 = vadd.f32 0.0, %v1146
        %1148 = vmatmul.bf16.gmra.mxu0 %v1071
        %v1149 = vpop.f32.mrf.mxu0
        %v1150 = vadd.f32 0.0, %v1149
        %v1151 = vpop.f32.mrf.mxu0
        %v1152 = vadd.f32 0.0, %v1151
        %1153 = vmatmul.bf16.gmra.mxu0 %v1074
        %v1154 = vpop.f32.mrf.mxu0
        %v1155 = vadd.f32 0.0, %v1154
        %v1156 = vpop.f32.mrf.mxu0
        %v1157 = vadd.f32 0.0, %v1156
        %1158 = vmatmul.bf16.gmra.mxu0 %v1077
        %v1159 = vpop.f32.mrf.mxu0
        %v1160 = vadd.f32 0.0, %v1159
        %v1161 = vpop.f32.mrf.mxu0
        %v1162 = vadd.f32 0.0, %v1161
        %1163 = vmatmul.bf16.gmra.mxu0 %v1080
        %v1164 = vpop.f32.mrf.mxu0
        %v1165 = vadd.f32 0.0, %v1164
        %v1166 = vpop.f32.mrf.mxu0
        %v1167 = vadd.f32 0.0, %v1166
        %1168 = vmatmul.bf16.gmra.mxu0 %v1083
        %v1169 = vpop.f32.mrf.mxu0
        %v1170 = vadd.f32 0.0, %v1169
        %v1171 = vpop.f32.mrf.mxu0
        %v1172 = vadd.f32 0.0, %v1171
        %1173 = vdwg.mxu0
        %v1190 = vunpack.c.l.b16 %v283
        %v1191 = vunpack.c.l.b16 %v284
        %v1192 = vunpack.c.l.b16 %v285
        %v1193 = vunpack.c.l.b16 %v286
        %v1194 = vunpack.c.l.b16 %v287
        %v1195 = vunpack.c.l.b16 %v288
        %v1196 = vunpack.c.l.b16 %v289
        %v1197 = vunpack.c.l.b16 %v290
        %v1198 = vunpack.c.l.b16 %v291
        %v1199 = vunpack.c.l.b16 %v292
        %v1200 = vunpack.c.l.b16 %v293
        %v1201 = vunpack.c.l.b16 %v294
        %v1202 = vunpack.c.l.b16 %v295
        %v1203 = vunpack.c.l.b16 %v296
        %v1204 = vunpack.c.l.b16 %v297
        %v1205 = vunpack.c.l.b16 %v298
        %v1206 = vpack.c.b16 %v1191, %v1190
        %v1207 = vpack.c.b16 %v1193, %v1192
        %v1208 = vpack.c.b16 %v1195, %v1194
        %v1209 = vpack.c.b16 %v1197, %v1196
        %v1210 = vpack.c.b16 %v1199, %v1198
        %v1211 = vpack.c.b16 %v1201, %v1200
        %v1212 = vpack.c.b16 %v1203, %v1202
        %v1213 = vpack.c.b16 %v1205, %v1204
        %1222 = vmatpush.bf16.msra.mxu0 %v1213
        %1223 = vmatpush.bf16.msra.mxu0 %v1212
        %1224 = vmatpush.bf16.msra.mxu0 %v1211
        %1225 = vmatpush.bf16.msra.mxu0 %v1210
        %1226 = vmatpush.bf16.msra.mxu0 %v1209
        %1227 = vmatpush.bf16.msra.mxu0 %v1208
        %1228 = vmatpush.bf16.msra.mxu0 %v1207
        %1229 = vmatpush.bf16.msra.mxu0 %v1206
        %1230 = vmatmul.bf16.gmra.mxu0 %v435
        %v1231 = vpop.f32.mrf.mxu0
        %v1232 = vadd.f32 %v1095, %v1231
        %v1233 = vpop.f32.mrf.mxu0
        %v1234 = vadd.f32 %v1097, %v1233
        %1235 = vmatmul.bf16.gmra.mxu0 %v436
        %v1236 = vpop.f32.mrf.mxu0
        %v1237 = vadd.f32 %v1100, %v1236
        %v1238 = vpop.f32.mrf.mxu0
        %v1239 = vadd.f32 %v1102, %v1238
        %1240 = vmatmul.bf16.gmra.mxu0 %v437
        %v1241 = vpop.f32.mrf.mxu0
        %v1242 = vadd.f32 %v1105, %v1241
        %v1243 = vpop.f32.mrf.mxu0
        %v1244 = vadd.f32 %v1107, %v1243
        %1245 = vmatmul.bf16.gmra.mxu0 %v438
        %v1246 = vpop.f32.mrf.mxu0
        %v1247 = vadd.f32 %v1110, %v1246
        %v1248 = vpop.f32.mrf.mxu0
        %v1249 = vadd.f32 %v1112, %v1248
        %1250 = vmatmul.bf16.gmra.mxu0 %v439
        %v1251 = vpop.f32.mrf.mxu0
        %v1252 = vadd.f32 %v1115, %v1251
        %v1253 = vpop.f32.mrf.mxu0
        %v1254 = vadd.f32 %v1117, %v1253
        %1255 = vmatmul.bf16.gmra.mxu0 %v440
        %v1256 = vpop.f32.mrf.mxu0
        %v1257 = vadd.f32 %v1120, %v1256
        %v1258 = vpop.f32.mrf.mxu0
        %v1259 = vadd.f32 %v1122, %v1258
        %1260 = vmatmul.bf16.gmra.mxu0 %v441
        %v1261 = vpop.f32.mrf.mxu0
        %v1262 = vadd.f32 %v1125, %v1261
        %v1263 = vpop.f32.mrf.mxu0
        %v1264 = vadd.f32 %v1127, %v1263
        %1265 = vmatmul.bf16.gmra.mxu0 %v442
        %v1266 = vpop.f32.mrf.mxu0
        %v1267 = vadd.f32 %v1130, %v1266
        %v1268 = vpop.f32.mrf.mxu0
        %v1269 = vadd.f32 %v1132, %v1268
        %1270 = vmatmul.bf16.gmra.mxu0 %v443
        %v1271 = vpop.f32.mrf.mxu0
        %v1272 = vadd.f32 %v1135, %v1271
        %v1273 = vpop.f32.mrf.mxu0
        %v1274 = vadd.f32 %v1137, %v1273
        %1275 = vmatmul.bf16.gmra.mxu0 %v444
        %v1276 = vpop.f32.mrf.mxu0
        %v1277 = vadd.f32 %v1140, %v1276
        %v1278 = vpop.f32.mrf.mxu0
        %v1279 = vadd.f32 %v1142, %v1278
        %1280 = vmatmul.bf16.gmra.mxu0 %v445
        %v1281 = vpop.f32.mrf.mxu0
        %v1282 = vadd.f32 %v1145, %v1281
        %v1283 = vpop.f32.mrf.mxu0
        %v1284 = vadd.f32 %v1147, %v1283
        %1285 = vmatmul.bf16.gmra.mxu0 %v446
        %v1286 = vpop.f32.mrf.mxu0
        %v1287 = vadd.f32 %v1150, %v1286
        %v1288 = vpop.f32.mrf.mxu0
        %v1289 = vadd.f32 %v1152, %v1288
        %1290 = vmatmul.bf16.gmra.mxu0 %v447
        %v1291 = vpop.f32.mrf.mxu0
        %v1292 = vadd.f32 %v1155, %v1291
        %v1293 = vpop.f32.mrf.mxu0
        %v1294 = vadd.f32 %v1157, %v1293
        %1295 = vmatmul.bf16.gmra.mxu0 %v448
        %v1296 = vpop.f32.mrf.mxu0
        %v1297 = vadd.f32 %v1160, %v1296
        %v1298 = vpop.f32.mrf.mxu0
        %v1299 = vadd.f32 %v1162, %v1298
        %1300 = vmatmul.bf16.gmra.mxu0 %v449
        %v1301 = vpop.f32.mrf.mxu0
        %v1302 = vadd.f32 %v1165, %v1301
        %v1303 = vpop.f32.mrf.mxu0
        %v1304 = vadd.f32 %v1167, %v1303
        %1305 = vmatmul.bf16.gmra.mxu0 %v450
        %v1306 = vpop.f32.mrf.mxu0
        %v1307 = vadd.f32 %v1170, %v1306
        %v1308 = vpop.f32.mrf.mxu0
        %v1309 = vadd.f32 %v1172, %v1308
        %1310 = vdwg.mxu0
        %v1311 = vld [vmem:[%s5] sm:$0x1]
        %v1313 = vperm.slane %v1311, 0
        %v1315 = vadd.f32 %v1232, %v1313
        %v1316 = vadd.f32 %v1234, %v1313
        %v1317 = vadd.f32 %v1237, %v1313
        %v1318 = vadd.f32 %v1239, %v1313
        %v1319 = vadd.f32 %v1242, %v1313
        %v1320 = vadd.f32 %v1244, %v1313
        %v1321 = vadd.f32 %v1247, %v1313
        %v1322 = vadd.f32 %v1249, %v1313
        %v1323 = vadd.f32 %v1252, %v1313
        %v1324 = vadd.f32 %v1254, %v1313
        %v1325 = vadd.f32 %v1257, %v1313
        %v1326 = vadd.f32 %v1259, %v1313
        %v1327 = vadd.f32 %v1262, %v1313
        %v1328 = vadd.f32 %v1264, %v1313
        %v1329 = vadd.f32 %v1267, %v1313
        %v1330 = vadd.f32 %v1269, %v1313
        %v1331 = vadd.f32 %v1272, %v1313
        %v1332 = vadd.f32 %v1274, %v1313
        %v1333 = vadd.f32 %v1277, %v1313
        %v1334 = vadd.f32 %v1279, %v1313
        %v1335 = vadd.f32 %v1282, %v1313
        %v1336 = vadd.f32 %v1284, %v1313
        %v1337 = vadd.f32 %v1287, %v1313
        %v1338 = vadd.f32 %v1289, %v1313
        %v1339 = vadd.f32 %v1292, %v1313
        %v1340 = vadd.f32 %v1294, %v1313
        %v1341 = vadd.f32 %v1297, %v1313
        %v1342 = vadd.f32 %v1299, %v1313
        %v1343 = vadd.f32 %v1302, %v1313
        %v1344 = vadd.f32 %v1304, %v1313
        %v1345 = vadd.f32 %v1307, %v1313
        %v1346 = vadd.f32 %v1309, %v1313
        %1347 = vst [vmem:[%s244] sm:$0xff] %v1315
        %1348 = vst [vmem:[%s244 + $0x8] sm:$0xff] %v1316
        %1349 = vst [vmem:[%s244 + $0x10] sm:$0xff] %v1317
        %1350 = vst [vmem:[%s244 + $0x18] sm:$0xff] %v1318
        %1351 = vst [vmem:[%s244 + $0x20] sm:$0xff] %v1319
        %1352 = vst [vmem:[%s244 + $0x28] sm:$0xff] %v1320
        %1353 = vst [vmem:[%s244 + $0x30] sm:$0xff] %v1321
        %1354 = vst [vmem:[%s244 + $0x38] sm:$0xff] %v1322
        %1355 = vst [vmem:[%s244 + $0x40] sm:$0xff] %v1323
        %1356 = vst [vmem:[%s244 + $0x48] sm:$0xff] %v1324
        %1357 = vst [vmem:[%s244 + $0x50] sm:$0xff] %v1325
        %1358 = vst [vmem:[%s244 + $0x58] sm:$0xff] %v1326
        %1359 = vst [vmem:[%s244 + $0x60] sm:$0xff] %v1327
        %1360 = vst [vmem:[%s244 + $0x68] sm:$0xff] %v1328
        %1361 = vst [vmem:[%s244 + $0x70] sm:$0xff] %v1329
        %1362 = vst [vmem:[%s244 + $0x78] sm:$0xff] %v1330
        %1363 = vst [vmem:[%s244 + $0x80] sm:$0xff] %v1331
        %1364 = vst [vmem:[%s244 + $0x88] sm:$0xff] %v1332
        %1365 = vst [vmem:[%s244 + $0x90] sm:$0xff] %v1333
        %1366 = vst [vmem:[%s244 + $0x98] sm:$0xff] %v1334
        %1367 = vst [vmem:[%s244 + $0xa0] sm:$0xff] %v1335
        %1368 = vst [vmem:[%s244 + $0xa8] sm:$0xff] %v1336
        %1369 = vst [vmem:[%s244 + $0xb0] sm:$0xff] %v1337
        %1370 = vst [vmem:[%s244 + $0xb8] sm:$0xff] %v1338
        %1371 = vst [vmem:[%s244 + $0xc0] sm:$0xff] %v1339
        %1372 = vst [vmem:[%s244 + $0xc8] sm:$0xff] %v1340
        %1373 = vst [vmem:[%s244 + $0xd0] sm:$0xff] %v1341
        %1374 = vst [vmem:[%s244 + $0xd8] sm:$0xff] %v1342
        %1375 = vst [vmem:[%s244 + $0xe0] sm:$0xff] %v1343
        %1376 = vst [vmem:[%s244 + $0xe8] sm:$0xff] %v1344
        %1377 = vst [vmem:[%s244 + $0xf0] sm:$0xff] %v1345
        %1378 = vst [vmem:[%s244 + $0xf8] sm:$0xff] %v1346
        %s1379 = sand.u32 %s159, 1
        %s1380 = scalar_lea.sflag [#allocation3], %s1379
        %s1381 = sand.u32 %s159, 1
        %s1382 = smul.addr %s1381, 256
        %s1383 = scalar_lea.vmem [#allocation2], %s1382
        // Predicated region
        $region45: #{_lambda_.1} parent=43 // pred_check
          %p1384 = pneg %p169
        $region46: #{_lambda_.1} parent=43 // pred_check_branch
          %1386 = sbr.rel (%p1384) target = $region48
        $region47: #{_lambda_.1} parent=43 // pred_region
          %1388 = vsyncadd %s1380, 0
          %s1389 = smul.addr %s20, 32
          %s1390 = smul.addr %s1389, 8
          %s1391 = scalar_lea.hbm %s6, %s1390
          %s1392 = sshll.u32 %s1383, 4
          %s1393 = int_to_ptr.vmem [resolvable:$true] %s1392
          %s1394 = sshll.u32 %s1391, 4
          %s1395 = int_to_ptr.hbm [resolvable:$true] %s1394
          %1400 = dma.vmem_to_hbm [thread:$0]  %s1393, 4096, %s1395, %s1380, 128, 128, 8
        $region48: #{_lambda_.1} parent=43 // pred_fallthru
          _
      $region44: #{_lambda_.1} parent=5 // pred_fallthru
        _
      %p1401 = scmp.le.s32.totalorder 2, %s15
      // Predicated region
      $region49: #{_lambda_.1} parent=5 // pred_check
        %p1402 = pneg %p1401
      $region50: #{_lambda_.1} parent=5 // pred_check_branch
        %1404 = sbr.rel (%p1402) target = $region52
      $region51: #{_lambda_.1} parent=5 // pred_region
        %s1405 = ssub.s32 %s15, 2
        // Predicated region
        $region53: #{_lambda_.1} parent=51 // pred_check
          %p1406 = pneg %p175
        $region54: #{_lambda_.1} parent=51 // pred_check_branch
          %1408 = sbr.rel (%p1406) target = $region56
        $region55: #{_lambda_.1} parent=51 // pred_region
          %s1409 = sand.u32 %s160, 1
          %s1410 = scalar_lea.sflag [#allocation3], %s1409
          %s1411 = sand.u32 %s160, 1
          %s1412 = smul.addr %s1411, 256
          %s1413 = scalar_lea.vmem [#allocation2], %s1412
          %1415 = dma.done %s1410, 4096
        $region56: #{_lambda_.1} parent=51 // pred_fallthru
          _
      $region52: #{_lambda_.1} parent=5 // pred_fallthru
        _
    $region6: #{_lambda_.1} parent=1 // loop_footer
      %s19 = sadd.s32 1, %s15
    $region7: #{_lambda_.1} parent=1 // loop_footer_branch
      %14 = sbr.rel target = $region3
    $region8: #{_lambda_.1} parent=1 // loop_exit
      _
    %1416 = vsyncpa [#allocation3], 1
    %s1417 = scalar_lea.sflag [#allocation3], 1
    %1418 = vsyncpa %s1417, 1

</llo_original>
